<compile_context>
chip_gen: v6e
topology: v6e:2x2x1
jax: 0.10.0
libtpu: 0.0.40
codegen_flags: <defaults>
</compile_context>

<pallas_src>
import functools

import jax
import jax.numpy as jnp
from jax import lax
from jax.experimental import pallas as pl
from jax.experimental.pallas import tpu as pltpu

_LANES = 128
_SUBLANES = 8


# --------------------------------------------------------------------------- #
# Kernel
# --------------------------------------------------------------------------- #
def _gp_partial_kernel(dydx_ref, out_ref, acc_ref, *, rows_total, block_rows,
                       steps, mask_rows):
    """Per-shard partial sum of squares of the flattened gradient.

    Per step (pure VPU): square the (B, block_rows, 128) block and fold the row
    axis into a tiny (B, 8, 128) accumulator with an in-register add tree.
    Last step of the shard: one small cross-sublane reduce -> (1, B, 128).
    """
    p = pl.program_id(0)
    s = pl.program_id(1)

    @pl.when(s == 0)
    def _():
        acc_ref[...] = jnp.zeros_like(acc_ref)

    g = dydx_ref[...].astype(jnp.float32)                 # (B, block_rows, 128)
    if mask_rows:
        # Ragged tail: rows at/after `rows_total` hold undefined boundary data
        # (or clamped duplicate data) — zero them before squaring.
        row0 = (p * steps + s) * block_rows                # logical (unclamped) row
        ridx = row0 + lax.broadcasted_iota(jnp.int32, g.shape, 1)
        g = jnp.where(ridx < rows_total, g, 0.0)

    gsq = g * g
    b = gsq.shape[0]
    gsq = gsq.reshape(b, block_rows // _SUBLANES, _SUBLANES, _LANES)
    acc_ref[...] += jnp.sum(gsq, axis=1)                   # (B, 8, 128), VPU adds

    @pl.when(s == steps - 1)
    def _():
        out_ref[...] = jnp.sum(acc_ref[...], axis=1)[None, :, :]   # (1, B, 128)


# --------------------------------------------------------------------------- #
# Static helpers
# --------------------------------------------------------------------------- #
def _cdiv(a, b):
    return -(-a // b)


def _round_up(a, b):
    return _cdiv(a, b) * b


def _tpu_info():
    try:
        return pltpu.get_tpu_info()
    except Exception:
        return None


def _vmem_capacity_bytes() -> int:
    info = _tpu_info()
    v = getattr(info, "vmem_capacity_bytes", None) if info is not None else None
    if isinstance(v, int) and v > 0:
        return v
    return 64 * 2**20            # conservative default (v7x-sized VMEM)


def _num_tensorcores() -> int:
    info = _tpu_info()
    if info is not None:
        for name in ("num_tensorcores", "num_cores", "core_count"):
            v = getattr(info, name, None)
            if isinstance(v, int) and v > 0:
                return max(1, min(int(v), 2))   # 2 TCs per chip on v7x, else 1
    return 1


def _jnp_penalty_from_grads(dydx_flat: jax.Array) -> jax.Array:
    ssq = jnp.sum(dydx_flat.astype(jnp.float32) ** 2, axis=1)
    return jnp.mean((jnp.sqrt(ssq) - 1.0) ** 2)


# --------------------------------------------------------------------------- #
# Wrapper around the Pallas reduction
# --------------------------------------------------------------------------- #
def _gradient_penalty_from_grads(dydx_flat: jax.Array, *, force_pallas: bool = False,
                                 max_block_rows=None) -> jax.Array:
    """mean((||dydx||_2 - 1)^2): batched sum-of-squares in Pallas, tiny glue in jnp."""
    B, D = dydx_flat.shape
    itemsize = jnp.dtype(dydx_flat.dtype).itemsize
    vmem_cap = _vmem_capacity_bytes()

    D128 = _round_up(D, _LANES)
    R = D128 // _LANES                       # 128-lane rows per batch element
    G = _cdiv(R, _SUBLANES)                  # 8-row groups

    floor_block_bytes = B * _SUBLANES * _LANES * itemsize
    too_small = (B * D * itemsize < (1 << 20)) and not force_pallas
    too_thin = R < _SUBLANES                 # can't form a dense (8,128) block
    too_wide = 2 * floor_block_bytes + (8 << 20) > vmem_cap
    # TODO(synk): tile the batch axis instead of falling back when B alone pushes
    # the minimal (B, 8, 128) block past the VMEM budget.
    if too_small or too_thin or too_wide:
        return _jnp_penalty_from_grads(dydx_flat)

    # ---- tile sizing (even split of rows into P*S chunks) ------------------
    # ~8 MiB input blocks: per-step grid overhead (<~0.35us) stays <10% even at
    # v7x bandwidth, and double buffering fits every generation's VMEM now that
    # the accumulator is tiny.
    target_block_bytes = min(8 << 20, max(1 << 20, (vmem_cap - (16 << 20)) // 3))
    group_bytes = B * _SUBLANES * _LANES * itemsize
    g_cap = max(1, target_block_bytes // group_bytes)
    if max_block_rows is not None:                        # test/tuning override
        g_cap = max(1, min(g_cap, max_block_rows // _SUBLANES))

    ncores = _num_tensorcores()
    P = ncores if (ncores > 1 and G >= 2 * ncores) else 1

    C = _round_up(max(_cdiv(G, g_cap), P), P)   # chunks, multiple of P
    gpc = _cdiv(G, C)                           # 8-row groups per chunk (even split)
    r_chunk = gpc * _SUBLANES                   # rows per block, multiple of 8
    S = C // P                                  # steps per shard
    C_valid = _cdiv(R, r_chunk)                 # blocks that touch real rows
    mask_rows = (C * r_chunk != R)
    clamp_idx = (C > C_valid)

    # Lane padding only (<=127 zeros per batch row); no-op when D % 128 == 0.
    if D128 != D:
        dydx_flat = jnp.pad(dydx_flat, ((0, 0), (0, D128 - D)))
    x3 = dydx_flat.reshape(B, R, _LANES)        # free row-major view

    def in_index_map(p, s):
        idx = p * S + s
        if clamp_idx:
            # Trailing grid steps of the last shard may lie entirely past the
            # data; clamp the DMA to the last valid block (rows mask to zero).
            idx = jnp.minimum(idx, C_valid - 1)
        return (0, idx, 0)

    block_bytes = B * r_chunk * _LANES * itemsize
    vmem_need = (2 * block_bytes                       # double-buffered input
                 + B * _SUBLANES * _LANES * 4          # accumulator scratch
                 + 2 * B * _LANES * 4                  # output block
                 + (2 << 20))                          # slack
    vmem_limit = int(min(max(32 << 20, int(vmem_need * 1.2)),
                         max(32 << 20, vmem_cap - (8 << 20))))

    if P > 1:
        dim_sem = (pltpu.CORE_PARALLEL, pltpu.ARBITRARY)   # real 2-TC split on v7x
    else:
        dim_sem = ("parallel", "arbitrary")

    kernel = functools.partial(_gp_partial_kernel, rows_total=R,
                               block_rows=r_chunk, steps=S, mask_rows=mask_rows)

    partial_out = pl.pallas_call(
        kernel,
        out_shape=jax.ShapeDtypeStruct((P, B, _LANES), jnp.float32),
        grid_spec=pltpu.PrefetchScalarGridSpec(
            num_scalar_prefetch=0,
            grid=(P, S),
            in_specs=[pl.BlockSpec((B, r_chunk, _LANES), in_index_map)],
            out_specs=pl.BlockSpec((1, B, _LANES), lambda p, s: (p, 0, 0)),
            scratch_shapes=[pltpu.VMEM((B, _SUBLANES, _LANES), jnp.float32)],
        ),
        compiler_params=pltpu.CompilerParams(
            dimension_semantics=dim_sem,
            vmem_limit_bytes=vmem_limit),
        cost_estimate=pl.CostEstimate(
            flops=3 * B * R * _LANES,
            transcendentals=0,
            bytes_accessed=B * R * _LANES * itemsize + P * B * _LANES * 4),
    )(x3)

    # Tiny (P, B, 128) combine + sqrt + batch mean: plain-JAX glue (negligible).
    ssq = jnp.sum(partial_out, axis=(0, 2))     # (B,)
    return jnp.mean((jnp.sqrt(ssq) - 1.0) ** 2)


# --------------------------------------------------------------------------- #
# Public API: equivalent of GradientPaneltyLoss().forward(y=f(x), x)
# --------------------------------------------------------------------------- #
def gradient_penalty_loss(f, x: jax.Array, *, force_pallas: bool = False,
                          max_block_rows=None) -> jax.Array:
    """torch.autograd.grad(..., grad_outputs=ones) is plain-JAX glue via vjp; the
    flatten + L2-norm + penalty reduction is the Pallas hot path."""
    y, vjp_fn = jax.vjp(f, x)
    dydx = vjp_fn(jnp.ones_like(y))[0]               # same shape as x
    dydx_flat = dydx.reshape(dydx.shape[0], -1)      # (B, prod(rest)), native dtype
    return _gradient_penalty_from_grads(dydx_flat, force_pallas=force_pallas,
                                        max_block_rows=max_block_rows)


def _reference(f, x):
    """Pure-JAX reference for correctness checking."""
    y, vjp_fn = jax.vjp(f, x)
    dydx = vjp_fn(jnp.ones_like(y))[0].reshape(x.shape[0], -1)
    norm = jnp.sqrt(jnp.sum(dydx.astype(jnp.float32) ** 2, axis=1))
    return jnp.mean((norm - 1.0) ** 2)


if __name__ == "__main__":
    key = jax.random.PRNGKey(0)
    k1, k2, k3 = jax.random.split(key, 3)

    # Deterministic stand-in "discriminator" whose output depends on x
    # (GradientPaneltyLoss itself has no parameters to initialize).
    def disc(x):
        return jnp.tanh(x) + 0.5 * x * x

    # Case 1: PyTorch-consistent NCHW demo input (B=2, C=4, H=W=16) -> D=1024.
    x1 = jax.random.normal(k1, (2, 4, 16, 16), dtype=jnp.float32)
    loss1 = jax.block_until_ready(
        jax.jit(functools.partial(gradient_penalty_loss, disc, force_pallas=True))(x1))
    ref1 = _reference(disc, x1)
    assert jnp.allclose(loss1, ref1, rtol=1e-5, atol=1e-5), (loss1, ref1)

    # Case 2: D not a multiple of 128 + multi-step grid with a ragged (masked)
    # last row-chunk (B=3, C=4, H=W=20 -> D=1600, forced 8-row blocks).
    x2 = jax.random.normal(k2, (3, 4, 20, 20), dtype=jnp.float32)
    loss2 = jax.block_until_ready(
        jax.jit(functools.partial(gradient_penalty_loss, disc,
                                  force_pallas=True, max_block_rows=8))(x2))
    ref2 = _reference(disc, x2)
    assert jnp.allclose(loss2, ref2, rtol=1e-5, atol=1e-5), (loss2, ref2)

    # Case 3: bf16 gradients streamed in native dtype, f32 in-kernel accumulation.
    x3 = jax.random.normal(k3, (2, 8, 32, 32), dtype=jnp.bfloat16)
    loss3 = jax.block_until_ready(
        jax.jit(functools.partial(gradient_penalty_loss, disc, force_pallas=True))(x3))
    ref3 = _reference(disc, x3)
    assert jnp.allclose(loss3, ref3, rtol=2e-3, atol=2e-3), (loss3, ref3)

    print("KERNEL_OK")
</pallas_src>

<mosaic_0001>
module attributes {stable_mosaic.version = 11 : i64} {
  func.func @_gp_partial_kernel(%arg0: i32, %arg1: i32, %arg2: memref<2x8x128xf32, #tpu.memory_space<vmem>>, %arg3: memref<1x2x128xf32, #tpu.memory_space<vmem>>, %arg4: memref<2x8x128xf32, #tpu.memory_space<vmem>>) attributes {dimension_semantics = [#tpu.dimension_semantics<parallel>, #tpu.dimension_semantics<arbitrary>], iteration_bounds = array<i64: 1, 1>, scalar_prefetch = 0 : i64, scratch_operands = 1 : i64, tpu.core_type = #tpu.core_type<tc>, window_params = [{transform_indices = @transform_0, window_bounds = array<i64: 2, 8, 128>}, {transform_indices = @transform_1, window_bounds = array<i64: 1, 2, 128>}]} {
    %c0_i32 = arith.constant 0 : i32
    %0 = arith.cmpi eq, %arg1, %c0_i32 : i32
    %1 = arith.extui %0 : i1 to i32
    %c0_i32_0 = arith.constant 0 : i32
    %2 = arith.cmpi ne, %1, %c0_i32_0 : i32
    scf.if %2 {
      %cst_11 = arith.constant 0.000000e+00 : f32
      %13 = vector.broadcast %cst_11 : f32 to vector<2x8x128xf32>
      %c0_12 = arith.constant 0 : index
      %c0_13 = arith.constant 0 : index
      %c0_14 = arith.constant 0 : index
      %14 = vector.load %arg4[%c0_12, %c0_13, %c0_14] : memref<2x8x128xf32, #tpu.memory_space<vmem>>, vector<2x8x128xf32>
      tpu.vector_store %arg4[%c0_12, %c0_13, %c0_14], %13 {strides = array<i32>} : memref<2x8x128xf32, #tpu.memory_space<vmem>>, vector<2x8x128xf32>,
    } else {
    }
    %c0 = arith.constant 0 : index
    %c0_1 = arith.constant 0 : index
    %c0_2 = arith.constant 0 : index
    %3 = vector.load %arg2[%c0, %c0_1, %c0_2] : memref<2x8x128xf32, #tpu.memory_space<vmem>>, vector<2x8x128xf32>
    %4 = arith.mulf %3, %3 : vector<2x8x128xf32>
    %5 = vector.shape_cast %4 : vector<2x8x128xf32> to vector<2x1x8x128xf32>
    %c0_3 = arith.constant 0 : index
    %c0_4 = arith.constant 0 : index
    %c0_5 = arith.constant 0 : index
    %6 = vector.load %arg4[%c0_3, %c0_4, %c0_5] : memref<2x8x128xf32, #tpu.memory_space<vmem>>, vector<2x8x128xf32>
    %cst = arith.constant dense<0.000000e+00> : vector<2x8x128xf32>
    %7 = vector.multi_reduction <add>, %5, %cst [1] : vector<2x1x8x128xf32> to vector<2x8x128xf32>
    %8 = arith.addf %6, %7 : vector<2x8x128xf32>
    %c0_6 = arith.constant 0 : index
    %c0_7 = arith.constant 0 : index
    %c0_8 = arith.constant 0 : index
    %9 = vector.load %arg4[%c0_6, %c0_7, %c0_8] : memref<2x8x128xf32, #tpu.memory_space<vmem>>, vector<2x8x128xf32>
    tpu.vector_store %arg4[%c0_6, %c0_7, %c0_8], %8 {strides = array<i32>} : memref<2x8x128xf32, #tpu.memory_space<vmem>>, vector<2x8x128xf32>,
    %c0_i32_9 = arith.constant 0 : i32
    %10 = arith.cmpi eq, %arg1, %c0_i32_9 : i32
    %11 = arith.extui %10 : i1 to i32
    %c0_i32_10 = arith.constant 0 : i32
    %12 = arith.cmpi ne, %11, %c0_i32_10 : i32
    scf.if %12 {
      %c0_11 = arith.constant 0 : index
      %c0_12 = arith.constant 0 : index
      %c0_13 = arith.constant 0 : index
      %13 = vector.load %arg4[%c0_11, %c0_12, %c0_13] : memref<2x8x128xf32, #tpu.memory_space<vmem>>, vector<2x8x128xf32>
      %cst_14 = arith.constant dense<0.000000e+00> : vector<2x128xf32>
      %14 = vector.multi_reduction <add>, %13, %cst_14 [1] : vector<2x8x128xf32> to vector<2x128xf32>
      %15 = vector.shape_cast %14 : vector<2x128xf32> to vector<1x2x128xf32>
      %c0_15 = arith.constant 0 : index
      %c0_16 = arith.constant 0 : index
      %c0_17 = arith.constant 0 : index
      %16 = vector.load %arg3[%c0_15, %c0_16, %c0_17] : memref<1x2x128xf32, #tpu.memory_space<vmem>>, vector<1x2x128xf32>
      tpu.vector_store %arg3[%c0_15, %c0_16, %c0_17], %15 {strides = array<i32>} : memref<1x2x128xf32, #tpu.memory_space<vmem>>, vector<1x2x128xf32>,
    } else {
    }
    return
  }
  func.func @transform_0(%arg0: i32, %arg1: i32) -> (i32, i32, i32) {
    %c1_i32 = arith.constant 1 : i32
    %0 = arith.muli %arg0, %c1_i32 : i32
    %1 = arith.addi %0, %arg1 : i32
    %c0_i32 = arith.constant 0 : i32
    %c0_i32_0 = arith.constant 0 : i32
    %c0_i32_1 = arith.constant 0 : i32
    return %c0_i32, %1, %c0_i32_0 : i32, i32, i32
  }
  func.func @transform_1(%arg0: i32, %arg1: i32) -> (i32, i32, i32) {
    %c0_i32 = arith.constant 0 : i32
    %c0_i32_0 = arith.constant 0 : i32
    %c0_i32_1 = arith.constant 0 : i32
    return %arg0, %c0_i32, %c0_i32_0 : i32, i32, i32
  }
}

</mosaic_0001>

<llo_original>
// kernel: gradient_penalty_loss.1
$region0: #{gradient_penalty_loss.1}
  #allocation0 [shape = 'u32[]', space=smem, size = 0x4, offset = 0x4, fixed_abs, tag = 'smem constant byte address 0x4 - core index']
  #allocation1 [shape = 'u32[144,128]{1,0:T(1,128)}', space=vmem, size = 0x12000, scoped, tag = 'internal scratch']
  #allocation2 [shape = 'f32[2,8,128]{2,1,0:T(8,128)}', space=vmem, size = 0x2000, scoped, tag = 'scratch operand']
  %s0 = inlined_call_operand.vmem [shape: f32[2,8,128], index: 0, kind: input, shape index: {}]
  %s1 = inlined_call_operand.vmem [shape: f32[1,2,128], index: 1, kind: output, shape index: {}]
  %s2 = sld [smem:[#allocation0]]
  $region22: #{gradient_penalty_loss.1} parent=0
    _
  %s4 = ssub.s32 1, %s2
  %s5 = scalar_select 0, %s4, %s2
  // Predicated region
  $region2: #{gradient_penalty_loss.1} parent=0 // pred_check
    _
  $region3: #{gradient_penalty_loss.1} parent=0 // pred_check_branch
    %7 = sbr.rel (0) target = $region5
  $region4: #{gradient_penalty_loss.1} parent=0 // pred_region
    %s8 = sadd.s32 0, 0
    %p9 = scmp.lt.s32.totalorder %s8, 0
    %s10 = scalar_select %p9, %s8, 0
    %s11 = smul.addr %s10, 8
    %s12 = scalar_lea.vmem %s0, %s11
    %s13 = sadd.s32 0, 0
  $region5: #{gradient_penalty_loss.1} parent=0 // pred_fallthru
    _
  %s14 = sadd.s32 0, 0
  %p15 = scmp.lt.s32.totalorder %s14, 0
  %s16 = scalar_select %p15, %s14, 0
  %s17 = smul.addr %s16, 8
  %s18 = scalar_lea.vmem %s0, %s17
  %s19 = sadd.s32 0, 0
  %p20 = scmp.lt.s32.totalorder %s19, 0
  %s21 = scalar_select %p20, %s19, 0
  %s22 = smul.addr %s21, 8
  %s23 = scalar_lea.vmem %s0, %s22
  %s24 = sadd.s32 0, 0
  %p25 = scmp.eq.s32.totalorder 0, 0
  // Predicated region
  $region6: #{gradient_penalty_loss.1} parent=0 // pred_check
    %p26 = pneg %p25
  $region7: #{gradient_penalty_loss.1} parent=0 // pred_check_branch
    %28 = sbr.rel (%p26) target = $region9
  $region8: #{gradient_penalty_loss.1} parent=0 // pred_region
    %29 = vst [vmem:[#allocation2] sm:$0xff] 0.0
    %30 = vst [vmem:[#allocation2 + $0x8] sm:$0xff] 0.0
  $region9: #{gradient_penalty_loss.1} parent=0 // pred_fallthru
    _
  %v31 = vld [vmem:[%s23] sm:$0xff]
  %v32 = vld [vmem:[%s23 + $0x8] sm:$0xff]
  %v33 = vmul.f32 %v31, %v31
  %v34 = vmul.f32 %v32, %v32
  %v35 = vld [vmem:[#allocation2] sm:$0xff]
  %v36 = vld [vmem:[#allocation2 + $0x8] sm:$0xff]
  %v37 = vadd.f32 %v33, 0.0
  %v38 = vadd.f32 %v34, 0.0
  %v39 = vadd.f32 %v35, %v37
  %v40 = vadd.f32 %v36, %v38
  %41 = vst [vmem:[#allocation2] sm:$0xff] %v39
  %42 = vst [vmem:[#allocation2 + $0x8] sm:$0xff] %v40
  // Predicated region
  $region10: #{gradient_penalty_loss.1} parent=0 // pred_check
    %p43 = pneg %p25
  $region11: #{gradient_penalty_loss.1} parent=0 // pred_check_branch
    %45 = sbr.rel (%p43) target = $region13
  $region12: #{gradient_penalty_loss.1} parent=0 // pred_region
    %v46 = vld [vmem:[#allocation2] sm:$0xff]
    %v47 = vld [vmem:[#allocation2 + $0x8] sm:$0xff]
    %v48 = vrot.slane %v46, 4
    %v49 = vadd.f32 %v46, %v48
    %v50 = vrot.slane %v49, 2
    %v51 = vadd.f32 %v49, %v50
    %v52 = vrot.slane %v51, 1
    %v53 = vadd.f32 %v51, %v52
    %v54 = vrot.slane %v47, 4
    %v55 = vadd.f32 %v47, %v54
    %v56 = vrot.slane %v55, 2
    %v57 = vadd.f32 %v55, %v56
    %v58 = vrot.slane %v57, 1
    %v59 = vadd.f32 %v57, %v58
    %vm62 = vcmask 1041409
    %v63 = vsel %vm62, %v59, %v53
    %65 = vst [vmem:[%s1] sm:$0x3] %v63
  $region13: #{gradient_penalty_loss.1} parent=0 // pred_fallthru
    _
  // Predicated region
  $region14: #{gradient_penalty_loss.1} parent=0 // pred_check
    _
  $region15: #{gradient_penalty_loss.1} parent=0 // pred_check_branch
    %67 = sbr.rel (0) target = $region17
  $region16: #{gradient_penalty_loss.1} parent=0 // pred_region
    _
  $region17: #{gradient_penalty_loss.1} parent=0 // pred_fallthru
    _
  // Predicated region
  $region18: #{gradient_penalty_loss.1} parent=0 // pred_check
    _
  $region19: #{gradient_penalty_loss.1} parent=0 // pred_check_branch
    %69 = sbr.rel (0) target = $region21
  $region20: #{gradient_penalty_loss.1} parent=0 // pred_region
    _
  $region21: #{gradient_penalty_loss.1} parent=0 // pred_fallthru
    _

</llo_original>
